<compile_context>
chip_gen: v5e
topology: v5e:2x2
jax: 0.10.0
libtpu: 0.0.40
codegen_flags: <defaults>
</compile_context>

<pallas_src>
import functools

import jax
import jax.numpy as jnp
from jax.experimental import pallas as pl
from jax.experimental.pallas import tpu as pltpu


def _round_up(n, m):
    return (n + m - 1) // m * m


def _cdiv(a, b):
    return (a + b - 1) // b


# ---------------------------------------------------------------------------
# Parameter packing (done once, outside the forward pass)
# ---------------------------------------------------------------------------
def pack_twin_q_params(params_q1, params_q2, obs_dim, act_dim):
    """Pack both Q heads into fused bf16 weight slabs + one f32 aux slab.

    params_q*: (W1, b1, W2, b2, W3, b3) with W as (in, out), b as (1, out).
    Returns (w1, w2, aux, meta):
      w1  : (K, 2*h1)  bf16   layer-1, heads concatenated along columns
      w2  : (2*h1, 2*h2) bf16 layer-2, block-diagonal across heads
      aux : (8, F)     f32    row0=b1, row1=b2, row2=[b3_q1,b3_q2,...],
                              row3=[w3_q1 | 0], row4=[0 | w3_q2]
    """
    w1a, b1a, w2a, b2a, w3a, b3a = params_q1
    w1b, b1b, w2b, b2b, w3b, b3b = params_q2
    K = int(obs_dim) + int(act_dim)
    h1 = int(w1a.shape[1])
    h2 = int(w2a.shape[1])
    F1, F2 = 2 * h1, 2 * h2
    F = max(F1, F2)

    # layer 1: both heads see the same [obs|act] input -> column concat
    w1 = jnp.zeros((K, F1), jnp.float32)
    w1 = w1.at[:, 0:h1].set(w1a)
    w1 = w1.at[:, h1:F1].set(w1b)

    # layer 2: block-diagonal (off-diagonal blocks stay exactly zero)
    w2 = jnp.zeros((F1, F2), jnp.float32)
    w2 = w2.at[0:h1, 0:h2].set(w2a)
    w2 = w2.at[h1:F1, h2:F2].set(w2b)

    # aux slab (stays f32: consumed on the VPU/XLU path only)
    aux = jnp.zeros((8, F), jnp.float32)
    aux = aux.at[0, 0:h1].set(b1a.reshape(-1))
    aux = aux.at[0, h1:F1].set(b1b.reshape(-1))
    aux = aux.at[1, 0:h2].set(b2a.reshape(-1))
    aux = aux.at[1, h2:F2].set(b2b.reshape(-1))
    aux = aux.at[2, 0].set(b3a.reshape(()))
    aux = aux.at[2, 1].set(b3b.reshape(()))
    aux = aux.at[3, 0:h2].set(w3a.reshape(-1))      # head-1 output weights
    aux = aux.at[4, h2:F2].set(w3b.reshape(-1))     # head-2 output weights

    meta = dict(K=K, h1=h1, h2=h2, F=F)
    return w1.astype(jnp.bfloat16), w2.astype(jnp.bfloat16), aux, meta


# ---------------------------------------------------------------------------
# Kernel
# ---------------------------------------------------------------------------
def _twin_q_kernel(x_ref, w1_ref, w2_ref, aux_ref, q_ref, *, h1, h2):
    F1, F2 = 2 * h1, 2 * h2

    x = x_ref[...]                                   # (tb, K)  f32
    aux = aux_ref[...]                               # (8, F)   f32

    # ---- fused layer 1: single MXU dot over K = obs_dim + act_dim ----------
    # bf16 operands (denser MXU pushes), f32 accumulation, f32 elementwise.
    h = jnp.dot(x.astype(jnp.bfloat16), w1_ref[...],
                preferred_element_type=jnp.float32)  # (tb, F1)
    h = jnp.maximum(h + aux[0:1, 0:F1], 0.0)

    # ---- fused layer 2 (block-diagonal across the two heads) ---------------
    h = jnp.dot(h.astype(jnp.bfloat16), w2_ref[...],
                preferred_element_type=jnp.float32)  # (tb, F2)
    h = jnp.maximum(h + aux[1:2, 0:F2], 0.0)

    # ---- output layer on VPU + XLU (only 2 useful columns: skip the MXU) ---
    # aux row 3 = [w3_q1 | zeros], row 4 = [zeros | w3_q2] -> masked lane sums.
    q1 = jnp.sum(h * aux[3:4, 0:F2], axis=-1, keepdims=True)   # (tb, 1)
    q2 = jnp.sum(h * aux[4:5, 0:F2], axis=-1, keepdims=True)   # (tb, 1)
    q_ref[:, 0:1] = q1 + aux[2:3, 0:1]
    q_ref[:, 1:2] = q2 + aux[2:3, 1:2]


# ---------------------------------------------------------------------------
# Wrapper
# ---------------------------------------------------------------------------
def twin_q_forward(obs, act, packed, *, tile_b=2048):
    """Pallas equivalent of MLPQFunction_double.forward.

    obs: (B, obs_dim) f32, act: (B, act_dim) f32
    packed: output of pack_twin_q_params
    returns: (q1, q2), each of shape (B,)
    """
    w1, w2, aux, meta = packed
    K, h1, h2 = meta["K"], meta["h1"], meta["h2"]
    B = obs.shape[0]
    assert obs.shape[1] + act.shape[1] == K

    # --- batch tiling --------------------------------------------------------
    # Large tiles amortize the ~0.35us/grid-step overhead; the 8192 cap keeps
    # the per-tile footprint far under v7x's 64 MiB VMEM (32 MiB scoped below).
    tile_b = _round_up(max(8, min(int(tile_b), 8192)), 8)
    if B >= 16:
        # v7x has 2 TensorCores: keep >=2 steps so the parallel axis shards.
        tile_b = min(tile_b, _round_up(_cdiv(B, 2), 8))
    else:
        tile_b = min(tile_b, _round_up(B, 8))
    B_pad = _round_up(B, tile_b)
    grid = (B_pad // tile_b,)

    # --- single concat (as in the torch module) + zero-pad to whole tiles ----
    x = jnp.concatenate([obs, act], axis=-1)
    if B_pad != B:
        x = jnp.pad(x, ((0, B_pad - B), (0, 0)))

    F1, F2 = 2 * h1, 2 * h2
    flops = 2 * B_pad * (K * F1 + F1 * F2) + 4 * B_pad * F2
    bytes_accessed = (4 * (x.size + aux.size + B_pad * 2)
                      + 2 * (w1.size + w2.size))

    kernel = functools.partial(_twin_q_kernel, h1=h1, h2=h2)

    q = pl.pallas_call(
        kernel,
        out_shape=jax.ShapeDtypeStruct((B_pad, 2), jnp.float32),
        grid_spec=pltpu.PrefetchScalarGridSpec(
            num_scalar_prefetch=0,
            grid=grid,
            in_specs=[
                pl.BlockSpec((tile_b, K), lambda i: (i, 0)),
                # weight/aux slabs: constant block index -> fetched once.
                pl.BlockSpec(w1.shape, lambda i: (0, 0)),
                pl.BlockSpec(w2.shape, lambda i: (0, 0)),
                pl.BlockSpec(aux.shape, lambda i: (0, 0)),
            ],
            out_specs=pl.BlockSpec((tile_b, 2), lambda i: (i, 0)),
        ),
        compiler_params=pltpu.CompilerParams(
            dimension_semantics=("parallel",),
            vmem_limit_bytes=32 * 1024 * 1024,
        ),
        cost_estimate=pl.CostEstimate(
            flops=flops, transcendentals=0, bytes_accessed=bytes_accessed),
    )(x, w1, w2, aux)

    q = q[:B]                       # drop padded rows
    return q[:, 0], q[:, 1]         # torch.squeeze(q, -1) per head


# ---------------------------------------------------------------------------
# Param construction + pure-JAX reference
# ---------------------------------------------------------------------------
def _xavier_linear(key, fan_in, fan_out):
    # Deterministic Xavier-uniform init (weight_init_Xavier analogue).
    limit = jnp.sqrt(6.0 / (fan_in + fan_out))
    w = jax.random.uniform(key, (fan_in, fan_out), jnp.float32, -limit, limit)
    b = jnp.zeros((1, fan_out), jnp.float32)
    return w, b


def make_params(key, sizes):
    """sizes = [in_dim, h1, h2, 1] -> (W1, b1, W2, b2, W3, b3)."""
    params = []
    keys = jax.random.split(key, len(sizes) - 1)
    for k, fin, fout in zip(keys, sizes[:-1], sizes[1:]):
        w, b = _xavier_linear(k, fin, fout)
        params += [w, b]
    return tuple(params)


def reference_forward(obs, act, params_q1, params_q2):
    x = jnp.concatenate([obs, act], axis=-1)

    def mlp3(p):
        w1, b1, w2, b2, w3, b3 = p
        h = jnp.maximum(x @ w1 + b1, 0.0)
        h = jnp.maximum(h @ w2 + b2, 0.0)
        return h @ w3 + b3

    return jnp.squeeze(mlp3(params_q1), -1), jnp.squeeze(mlp3(params_q2), -1)


if __name__ == "__main__":
    # Small shapes consistent with the module: obs_dim=12, act_dim=4,
    # hidden_dim=(32, 32), batch=8.
    obs_dim, act_dim, hidden = 12, 4, [32, 32]
    batch = 8
    sizes = [obs_dim + act_dim] + hidden + [1]

    key = jax.random.PRNGKey(0)
    k_obs, k_act, k_q1, k_q2 = jax.random.split(key, 4)

    obs = jax.random.normal(k_obs, (batch, obs_dim), jnp.float32)
    act = jax.random.normal(k_act, (batch, act_dim), jnp.float32)

    params_q1 = make_params(k_q1, sizes)
    params_q2 = make_params(k_q2, sizes)

    # Pack once (exact-zero off-diagonal blocks => heads cannot mix).
    packed = pack_twin_q_params(params_q1, params_q2, obs_dim, act_dim)

    q1, q2 = twin_q_forward(obs, act, packed)
    jax.block_until_ready((q1, q2))

    # Sanity check against the pure-JAX f32 reference (bf16 MXU inputs with
    # f32 accumulation -> loosened tolerance, per review).
    r1, r2 = reference_forward(obs, act, params_q1, params_q2)
    assert q1.shape == (batch,) and q2.shape == (batch,)
    assert jnp.allclose(q1, r1, atol=5e-2, rtol=5e-2)
    assert jnp.allclose(q2, r2, atol=5e-2, rtol=5e-2)

    # Second check: non-divisible batch exercises the zero-pad + multi-tile
    # grid path (grid > 1, padded rows sliced off).
    batch2 = 40
    k_o2, k_a2 = jax.random.split(jax.random.PRNGKey(1), 2)
    obs2 = jax.random.normal(k_o2, (batch2, obs_dim), jnp.float32)
    act2 = jax.random.normal(k_a2, (batch2, act_dim), jnp.float32)
    q1b, q2b = twin_q_forward(obs2, act2, packed, tile_b=16)
    jax.block_until_ready((q1b, q2b))
    r1b, r2b = reference_forward(obs2, act2, params_q1, params_q2)
    assert q1b.shape == (batch2,) and q2b.shape == (batch2,)
    assert jnp.allclose(q1b, r1b, atol=5e-2, rtol=5e-2)
    assert jnp.allclose(q2b, r2b, atol=5e-2, rtol=5e-2)

    print("KERNEL_OK")
</pallas_src>

<mosaic_0001>
module attributes {stable_mosaic.version = 11 : i64} {
  func.func @_twin_q_kernel(%arg0: i32, %arg1: memref<8x16xf32, #tpu.memory_space<vmem>>, %arg2: memref<16x64xbf16, #tpu.memory_space<vmem>>, %arg3: memref<64x64xbf16, #tpu.memory_space<vmem>>, %arg4: memref<8x64xf32, #tpu.memory_space<vmem>>, %arg5: memref<8x2xf32, #tpu.memory_space<vmem>>) attributes {dimension_semantics = [#tpu.dimension_semantics<parallel>], iteration_bounds = array<i64: 1>, scalar_prefetch = 0 : i64, scratch_operands = 0 : i64, tpu.core_type = #tpu.core_type<tc>, window_params = [{transform_indices = @transform_0, window_bounds = array<i64: 8, 16>}, {pipeline_mode = #tpu.pipeline_mode<synchronous>, transform_indices = @transform_1, window_bounds = array<i64: 16, 64>}, {pipeline_mode = #tpu.pipeline_mode<synchronous>, transform_indices = @transform_2, window_bounds = array<i64: 64, 64>}, {pipeline_mode = #tpu.pipeline_mode<synchronous>, transform_indices = @transform_3, window_bounds = array<i64: 8, 64>}, {transform_indices = @transform_4, window_bounds = array<i64: 8, 2>}]} {
    %c0 = arith.constant 0 : index
    %c0_0 = arith.constant 0 : index
    %0 = vector.load %arg1[%c0, %c0_0] : memref<8x16xf32, #tpu.memory_space<vmem>>, vector<8x16xf32>
    %c0_1 = arith.constant 0 : index
    %c0_2 = arith.constant 0 : index
    %1 = vector.load %arg4[%c0_1, %c0_2] : memref<8x64xf32, #tpu.memory_space<vmem>>, vector<8x64xf32>
    %2 = arith.truncf %0 : vector<8x16xf32> to vector<8x16xbf16>
    %c0_3 = arith.constant 0 : index
    %c0_4 = arith.constant 0 : index
    %3 = vector.load %arg2[%c0_3, %c0_4] : memref<16x64xbf16, #tpu.memory_space<vmem>>, vector<16x64xbf16>
    %cst = arith.constant dense<0.000000e+00> : vector<8x64xf32>
    %4 = tpu.matmul %2, %3, %cst {dimension_numbers = #tpu.dot_dimension_numbers<[1], [0], [0], [1], [0, 0, 1, 1], [], []>} : vector<8x16xbf16>, vector<16x64xbf16>, vector<8x64xf32> -> vector<8x64xf32>
    %5 = vector.extract_strided_slice %1 {offsets = [0, 0], sizes = [1, 64], strides = [1, 1]} : vector<8x64xf32> to vector<1x64xf32>
    %6 = vector.broadcast %5 : vector<1x64xf32> to vector<8x64xf32>
    %7 = arith.addf %4, %6 : vector<8x64xf32>
    %cst_5 = arith.constant 0.000000e+00 : f32
    %8 = vector.broadcast %cst_5 : f32 to vector<8x64xf32>
    %9 = arith.maximumf %7, %8 : vector<8x64xf32>
    %10 = arith.truncf %9 : vector<8x64xf32> to vector<8x64xbf16>
    %c0_6 = arith.constant 0 : index
    %c0_7 = arith.constant 0 : index
    %11 = vector.load %arg3[%c0_6, %c0_7] : memref<64x64xbf16, #tpu.memory_space<vmem>>, vector<64x64xbf16>
    %cst_8 = arith.constant dense<0.000000e+00> : vector<8x64xf32>
    %12 = tpu.matmul %10, %11, %cst_8 {dimension_numbers = #tpu.dot_dimension_numbers<[1], [0], [0], [1], [0, 0, 1, 1], [], []>} : vector<8x64xbf16>, vector<64x64xbf16>, vector<8x64xf32> -> vector<8x64xf32>
    %13 = vector.extract_strided_slice %1 {offsets = [1, 0], sizes = [1, 64], strides = [1, 1]} : vector<8x64xf32> to vector<1x64xf32>
    %14 = vector.broadcast %13 : vector<1x64xf32> to vector<8x64xf32>
    %15 = arith.addf %12, %14 : vector<8x64xf32>
    %cst_9 = arith.constant 0.000000e+00 : f32
    %16 = vector.broadcast %cst_9 : f32 to vector<8x64xf32>
    %17 = arith.maximumf %15, %16 : vector<8x64xf32>
    %18 = vector.extract_strided_slice %1 {offsets = [3, 0], sizes = [1, 64], strides = [1, 1]} : vector<8x64xf32> to vector<1x64xf32>
    %19 = vector.broadcast %18 : vector<1x64xf32> to vector<8x64xf32>
    %20 = arith.mulf %17, %19 : vector<8x64xf32>
    %cst_10 = arith.constant dense<0.000000e+00> : vector<8xf32>
    %21 = vector.multi_reduction <add>, %20, %cst_10 [1] : vector<8x64xf32> to vector<8xf32>
    %22 = vector.shape_cast %21 : vector<8xf32> to vector<8x1xf32>
    %23 = vector.extract_strided_slice %1 {offsets = [4, 0], sizes = [1, 64], strides = [1, 1]} : vector<8x64xf32> to vector<1x64xf32>
    %24 = vector.broadcast %23 : vector<1x64xf32> to vector<8x64xf32>
    %25 = arith.mulf %17, %24 : vector<8x64xf32>
    %cst_11 = arith.constant dense<0.000000e+00> : vector<8xf32>
    %26 = vector.multi_reduction <add>, %25, %cst_11 [1] : vector<8x64xf32> to vector<8xf32>
    %27 = vector.shape_cast %26 : vector<8xf32> to vector<8x1xf32>
    %28 = vector.extract_strided_slice %1 {offsets = [2, 0], sizes = [1, 1], strides = [1, 1]} : vector<8x64xf32> to vector<1x1xf32>
    %29 = vector.broadcast %28 : vector<1x1xf32> to vector<8x1xf32>
    %30 = arith.addf %22, %29 : vector<8x1xf32>
    %c0_12 = arith.constant 0 : index
    %c0_13 = arith.constant 0 : index
    %31 = vector.load %arg5[%c0_12, %c0_13] : memref<8x2xf32, #tpu.memory_space<vmem>>, vector<8x1xf32>
    tpu.vector_store %arg5[%c0_12, %c0_13], %30 {strides = array<i32>} : memref<8x2xf32, #tpu.memory_space<vmem>>, vector<8x1xf32>,
    %32 = vector.extract_strided_slice %1 {offsets = [2, 1], sizes = [1, 1], strides = [1, 1]} : vector<8x64xf32> to vector<1x1xf32>
    %33 = vector.broadcast %32 : vector<1x1xf32> to vector<8x1xf32>
    %34 = arith.addf %27, %33 : vector<8x1xf32>
    %c0_14 = arith.constant 0 : index
    %c1 = arith.constant 1 : index
    %35 = vector.load %arg5[%c0_14, %c1] : memref<8x2xf32, #tpu.memory_space<vmem>>, vector<8x1xf32>
    tpu.vector_store %arg5[%c0_14, %c1], %34 {strides = array<i32>} : memref<8x2xf32, #tpu.memory_space<vmem>>, vector<8x1xf32>,
    return
  }
  func.func @transform_0(%arg0: i32) -> (i32, i32) {
    %c0_i32 = arith.constant 0 : i32
    %c0_i32_0 = arith.constant 0 : i32
    return %arg0, %c0_i32 : i32, i32
  }
  func.func @transform_1(%arg0: i32) -> (i32, i32) {
    %c0_i32 = arith.constant 0 : i32
    %c0_i32_0 = arith.constant 0 : i32
    %c0_i32_1 = arith.constant 0 : i32
    return %c0_i32, %c0_i32_0 : i32, i32
  }
  func.func @transform_2(%arg0: i32) -> (i32, i32) {
    %c0_i32 = arith.constant 0 : i32
    %c0_i32_0 = arith.constant 0 : i32
    %c0_i32_1 = arith.constant 0 : i32
    return %c0_i32, %c0_i32_0 : i32, i32
  }
  func.func @transform_3(%arg0: i32) -> (i32, i32) {
    %c0_i32 = arith.constant 0 : i32
    %c0_i32_0 = arith.constant 0 : i32
    %c0_i32_1 = arith.constant 0 : i32
    return %c0_i32, %c0_i32_0 : i32, i32
  }
  func.func @transform_4(%arg0: i32) -> (i32, i32) {
    %c0_i32 = arith.constant 0 : i32
    %c0_i32_0 = arith.constant 0 : i32
    return %arg0, %c0_i32 : i32, i32
  }
}

</mosaic_0001>

<llo_original>
// kernel: tpu_custom_call.1
$region0: #{tpu_custom_call.1}
  #allocation0 [shape = 'u32[]', space=smem, size = 0x4, offset = 0x4, fixed_abs, tag = 'smem constant byte address 0x4 - core index']
  #allocation1 [shape = 'u32[72,128]{1,0:T(1,128)}', space=vmem, size = 0x9000, scoped, tag = 'internal scratch']
  %s0 = inlined_call_operand.hbm [shape: f32[8,16], index: 0, kind: input, shape index: {}]
  %s1 = inlined_call_operand.hbm [shape: bf16[16,64], index: 1, kind: input, shape index: {}]
  %s2 = inlined_call_operand.hbm [shape: bf16[64,64], index: 2, kind: input, shape index: {}]
  %s3 = inlined_call_operand.hbm [shape: f32[8,64], index: 3, kind: input, shape index: {}]
  %s4 = inlined_call_operand.vmem [shape: f32[8,2], index: 4, kind: output, shape index: {}]
  %s5 = sld [smem:[#allocation0]]
  $region42: #{tpu_custom_call.1} parent=0
    _
  %s7 = ssub.s32 1, %s5
  %s8 = scalar_select 0, %s7, %s5
  $region1: #{tpu_custom_call.1} parent=0
    #allocation2 [shape = 'u8[4096]{0}', space=vmem, size = 0x1000, scoped, tag = 'input window, operand 0, single buffered']
    #allocation3 [shape = 's32[1]{0}', space=sflag, size = 0x4, scoped, tag = 'scoped memory for tpu_custom_call.1']
    #allocation4 [shape = 'u8[4096]{0}', space=vmem, size = 0x1000, scoped, tag = 'input window, operand 1, single buffered']
    #allocation5 [shape = 's32[1]{0}', space=sflag, size = 0x4, scoped, tag = 'scoped memory for tpu_custom_call.1']
    #allocation6 [shape = 'u8[16384]{0}', space=vmem, size = 0x4000, scoped, tag = 'input window, operand 2, single buffered']
    #allocation7 [shape = 'u8[4096]{0}', space=vmem, size = 0x1000, scoped, tag = 'input window, operand 3, single buffered']
    #allocation8 [shape = 's32[1]{0}', space=sflag, size = 0x4, scoped, tag = 'scoped memory for tpu_custom_call.1']
    %9 = vsyncpa [#allocation3], 0
    %10 = vsyncpa [#allocation5], 0
    %11 = vsyncpa [#allocation8], 0
    // Predicated region
    $region2: #{tpu_custom_call.1} parent=1 // pred_check
      _
    $region3: #{tpu_custom_call.1} parent=1 // pred_check_branch
      %13 = sbr.rel (0) target = $region5
    $region4: #{tpu_custom_call.1} parent=1 // pred_region
      %15 = vsyncadd [#allocation3], 0
      %s17 = sshll.u32 %s0, 4
      %s18 = int_to_ptr.hbm [resolvable:$true] %s17
      %s19 = sshll.u32 [#allocation2], 4
      %s20 = int_to_ptr.vmem [resolvable:$true] %s19
      %22 = dma.hbm_to_vmem [thread:$0]  %s18, 128, %s20, [#allocation3]
    $region5: #{tpu_custom_call.1} parent=1 // pred_fallthru
      _
    // Predicated region
    $region6: #{tpu_custom_call.1} parent=1 // pred_check
      _
    $region7: #{tpu_custom_call.1} parent=1 // pred_check_branch
      %24 = sbr.rel (0) target = $region9
    $region8: #{tpu_custom_call.1} parent=1 // pred_region
      %26 = vsyncadd [#allocation5], 0
      %s27 = sshll.u32 %s1, 4
      %s28 = int_to_ptr.hbm [resolvable:$true] %s27
      %s29 = sshll.u32 [#allocation4], 4
      %s30 = int_to_ptr.vmem [resolvable:$true] %s29
      %35 = dma.hbm_to_vmem [thread:$0]  %s28, 128, %s30, [#allocation5], 64, 64, 4
    $region9: #{tpu_custom_call.1} parent=1 // pred_fallthru
      _
    // Predicated region
    $region10: #{tpu_custom_call.1} parent=1 // pred_check
      _
    $region11: #{tpu_custom_call.1} parent=1 // pred_check_branch
      %37 = sbr.rel (0) target = $region13
    $region12: #{tpu_custom_call.1} parent=1 // pred_region
      %39 = vsyncadd [#allocation5], 0
      %s40 = sshll.u32 %s2, 4
      %s41 = int_to_ptr.hbm [resolvable:$true] %s40
      %s42 = sshll.u32 [#allocation6], 4
      %s43 = int_to_ptr.vmem [resolvable:$true] %s42
      %48 = dma.hbm_to_vmem [thread:$0]  %s41, 512, %s43, [#allocation5], 64, 64, 4
    $region13: #{tpu_custom_call.1} parent=1 // pred_fallthru
      _
    // Predicated region
    $region14: #{tpu_custom_call.1} parent=1 // pred_check
      _
    $region15: #{tpu_custom_call.1} parent=1 // pred_check_branch
      %50 = sbr.rel (0) target = $region17
    $region16: #{tpu_custom_call.1} parent=1 // pred_region
      %52 = vsyncadd [#allocation8], 0
      %s54 = sshll.u32 %s3, 4
      %s55 = int_to_ptr.hbm [resolvable:$true] %s54
      %s56 = sshll.u32 [#allocation7], 4
      %s57 = int_to_ptr.vmem [resolvable:$true] %s56
      %59 = dma.hbm_to_vmem [thread:$0]  %s55, 128, %s57, [#allocation8]
    $region17: #{tpu_custom_call.1} parent=1 // pred_fallthru
      _
    // Predicated region
    $region18: #{tpu_custom_call.1} parent=1 // pred_check
      _
    $region19: #{tpu_custom_call.1} parent=1 // pred_check_branch
      %61 = sbr.rel (0) target = $region21
    $region20: #{tpu_custom_call.1} parent=1 // pred_region
      %63 = dma.done [#allocation3], 128
    $region21: #{tpu_custom_call.1} parent=1 // pred_fallthru
      _
    // Predicated region
    $region22: #{tpu_custom_call.1} parent=1 // pred_check
      _
    $region23: #{tpu_custom_call.1} parent=1 // pred_check_branch
      %65 = sbr.rel (0) target = $region25
    $region24: #{tpu_custom_call.1} parent=1 // pred_region
      %67 = dma.done [#allocation5], 128
    $region25: #{tpu_custom_call.1} parent=1 // pred_fallthru
      _
    // Predicated region
    $region26: #{tpu_custom_call.1} parent=1 // pred_check
      _
    $region27: #{tpu_custom_call.1} parent=1 // pred_check_branch
      %69 = sbr.rel (0) target = $region29
    $region28: #{tpu_custom_call.1} parent=1 // pred_region
      %71 = dma.done [#allocation5], 512
    $region29: #{tpu_custom_call.1} parent=1 // pred_fallthru
      _
    // Predicated region
    $region30: #{tpu_custom_call.1} parent=1 // pred_check
      _
    $region31: #{tpu_custom_call.1} parent=1 // pred_check_branch
      %73 = sbr.rel (0) target = $region33
    $region32: #{tpu_custom_call.1} parent=1 // pred_region
      %75 = dma.done [#allocation8], 128
    $region33: #{tpu_custom_call.1} parent=1 // pred_fallthru
      _
    %v77 = vld [vmem:[#allocation2] sm:$0xff]
    %v78 = vld [vmem:[#allocation7] sm:$0xff]
    %v79 = vpack.c.bf16 %v77, %v77
    %v80 = vld [vmem:[#allocation4] sm:$0xf]
    %v81 = vld [vmem:[#allocation4 + $0x4] sm:$0xf]
    %v82 = vperm.slane %v78, 0
    %v85 = vunpack.c.l.b16 %v80
    %v86 = vunpack.c.l.b16 %v81
    %v87 = vpack.c.b16 %v86, %v85
    %vm89 = vcmask 130048
    %v91 = vsel %vm89, %v79, 0
    %93 = vmatpush.bf16.msra.mxu0 0
    %94 = vmatpush.bf16.msra.mxu0 0
    %95 = vmatpush.bf16.msra.mxu0 0
    %96 = vmatpush.bf16.msra.mxu0 0
    %97 = vmatpush.bf16.msra.mxu0 0
    %98 = vmatpush.bf16.msra.mxu0 0
    %99 = vmatpush.bf16.msra.mxu0 0
    %100 = vmatpush.bf16.msra.mxu0 %v87
    %101 = vmatmul.bf16.gmra.mxu0 %v91
    %v102 = vpop.f32.mrf.mxu0
    %v103 = vadd.f32 %v82, %v102
    %v104 = vpop.f32.mrf.mxu0
    %105 = vdwg.mxu0
    %v106 = vmax.f32 %v103, 0.0
    %v107 = vpack.c.bf16 %v106, %v106
    %v108 = vld [vmem:[#allocation6] sm:$0xf]
    %v109 = vld [vmem:[#allocation6 + $0x4] sm:$0xf]
    %v110 = vld [vmem:[#allocation6 + $0x8] sm:$0xf]
    %v111 = vld [vmem:[#allocation6 + $0xc] sm:$0xf]
    %v112 = vld [vmem:[#allocation6 + $0x10] sm:$0xf]
    %v113 = vld [vmem:[#allocation6 + $0x14] sm:$0xf]
    %v114 = vld [vmem:[#allocation6 + $0x18] sm:$0xf]
    %v115 = vld [vmem:[#allocation6 + $0x1c] sm:$0xf]
    %v116 = vperm.slane %v78, 1
    %v125 = vunpack.c.l.b16 %v108
    %v126 = vunpack.c.l.b16 %v109
    %v127 = vunpack.c.l.b16 %v110
    %v128 = vunpack.c.l.b16 %v111
    %v129 = vunpack.c.l.b16 %v112
    %v130 = vunpack.c.l.b16 %v113
    %v131 = vunpack.c.l.b16 %v114
    %v132 = vunpack.c.l.b16 %v115
    %v133 = vpack.c.b16 %v126, %v125
    %v134 = vpack.c.b16 %v128, %v127
    %v135 = vpack.c.b16 %v130, %v129
    %v136 = vpack.c.b16 %v132, %v131
    %vm141 = vcmask 523264
    %v143 = vsel %vm141, %v107, 0
    %145 = vmatpush.bf16.msra.mxu0 0
    %146 = vmatpush.bf16.msra.mxu0 0
    %147 = vmatpush.bf16.msra.mxu0 0
    %148 = vmatpush.bf16.msra.mxu0 0
    %149 = vmatpush.bf16.msra.mxu0 %v136
    %150 = vmatpush.bf16.msra.mxu0 %v135
    %151 = vmatpush.bf16.msra.mxu0 %v134
    %152 = vmatpush.bf16.msra.mxu0 %v133
    %153 = vmatmul.bf16.gmra.mxu0 %v143
    %v154 = vpop.f32.mrf.mxu0
    %v155 = vadd.f32 %v116, %v154
    %v156 = vpop.f32.mrf.mxu0
    %157 = vdwg.mxu0
    %v158 = vmax.f32 %v155, 0.0
    %v159 = vperm.slane %v78, 3
    %v160 = vmul.f32 %v158, %v159
    %v161 = vsel %vm141, %v160, 0.0
    %162 = vadd.xlane.f32.xlu0 %v161
    %v163 = vpop.xlane.xlu0 %162
    %v164 = vperm.slane %v78, 4
    %v165 = vmul.f32 %v158, %v164
    %v166 = vsel %vm141, %v165, 0.0
    %167 = vadd.xlane.f32.xlu0 %v166
    %v168 = vpop.xlane.xlu0 %167
    %v169 = vperm.slane %v78, 2
    %v170 = vadd.f32 %v163, %v169
    %vm171 = vcmask 7168
    %172 = vst.msk [vmem:[%s4] sm:$0xff] %vm171, %v170
    %v173 = vadd.f32 %v168, %v169
    %vm174 = vcmask 15368
    %175 = vst.msk [vmem:[%s4] sm:$0xff] %vm174, %v173
    // Predicated region
    $region34: #{tpu_custom_call.1} parent=1 // pred_check
      _
    $region35: #{tpu_custom_call.1} parent=1 // pred_check_branch
      %177 = sbr.rel (0) target = $region37
    $region36: #{tpu_custom_call.1} parent=1 // pred_region
      _
    $region37: #{tpu_custom_call.1} parent=1 // pred_fallthru
      _
    // Predicated region
    $region38: #{tpu_custom_call.1} parent=1 // pred_check
      _
    $region39: #{tpu_custom_call.1} parent=1 // pred_check_branch
      %179 = sbr.rel (0) target = $region41
    $region40: #{tpu_custom_call.1} parent=1 // pred_region
      _
    $region41: #{tpu_custom_call.1} parent=1 // pred_fallthru
      _
    %180 = vsyncpa [#allocation3], 1
    %181 = vsyncpa [#allocation5], 1
    %182 = vsyncpa [#allocation8], 1

</llo_original>
